<compile_context>
chip_gen: v6e
topology: v6e:2x2x1
jax: 0.10.0
libtpu: 0.0.40
codegen_flags: <defaults>
</compile_context>

<pallas_src>
import functools

import jax
import jax.numpy as jnp
from jax import lax
from jax.experimental import pallas as pl
from jax.experimental.pallas import tpu as pltpu


def _cluster_loss_kernel(bi_ref, bj_ref, h_i_ref, h_jt_ref, lab_i_ref,
                         lab_j_ref, out_ref, *, inv_temperature):
    # bi_ref / bj_ref are the scalar-prefetch SMEM refs (consumed by the
    # index_maps; unused in the body).
    del bi_ref, bj_ref

    hi = h_i_ref[...]                                   # (ts, D)  f32 or bf16
    hjt = h_jt_ref[...]                                 # (D, ts)  f32 or bf16

    # logits tile = (H H^T) / temperature, f32 accumulation on the MXU.
    x = jnp.dot(hi, hjt, preferred_element_type=jnp.float32) * inv_temperature

    # label mask tile: labels[i] == labels[j]  (kept boolean)
    mask = lab_i_ref[...] == lab_j_ref[...]             # (ts,1)==(1,ts) -> (ts,ts)

    # binary_cross_entropy_with_logits, numerically stable form:
    #   max(x, 0) - x*y + log1p(exp(-|x|)),  y = mask
    ax = jnp.abs(x)
    loss = 0.5 * (x + ax) - jnp.where(mask, x, 0.0) + jnp.log1p(jnp.exp(-ax))

    # Sublane-only reduce, lanes stay wide; per-tile partial written out.
    out_ref[...] = jnp.sum(loss, axis=0, keepdims=True)[None]   # (1, 1, ts)


def _pick_vmem_limit(ts, D, in_bytes_per_elem):
    # double-buffered input blocks + labels + output + f32 epilogue temps.
    dma = 2 * (2 * ts * D * in_bytes_per_elem + (ts + ts) * 4)
    epilogue = 5 * ts * ts * 4
    need = dma + epilogue + (2 << 20)
    # Valid on every generation (v7x scoped default 32 MiB, 64 MiB physical).
    return int(min(max(need, 8 << 20), 32 << 20))


def cluster_loss(hidden_states, pseudo_labels, temperature, *,
                 block=512, matmul_dtype=jnp.float32):
    """hidden_states: (N, D) float, pseudo_labels: (N,) int -> scalar f32.

    matmul_dtype=jnp.bfloat16 enables MXU-native operands (~2-3x faster matmul
    path, half the DMA/VMEM) at ~1e-3 relative accuracy on the logits.
    """
    N, D = hidden_states.shape
    ts = min(block, N)                      # square tiles (needed for symmetry)
    assert N % ts == 0, "N must tile evenly by the block size"
    assert (ts % 128 == 0) or (ts == N), "tile must be 128-aligned or full"

    # Hoisted L2 normalization (f32): x * rsqrt(max(||x||^2, eps^2)).
    h = hidden_states.astype(jnp.float32)
    sumsq = jnp.sum(h * h, axis=1, keepdims=True)
    hn = h * lax.rsqrt(jnp.maximum(sumsq, jnp.float32(1e-24)))   # (N, D) f32
    hn_op = hn.astype(matmul_dtype)                              # (N, D)
    hnt_op = hn_op.T                                             # (D, N) lane-dense RHS

    labels_col = pseudo_labels.astype(jnp.int32).reshape(N, 1)
    labels_row = pseudo_labels.astype(jnp.int32).reshape(1, N)

    # Upper-triangular block list (symmetric loss matrix): off-diagonal
    # blocks are counted twice in the final sum.
    nb = N // ts
    bi_l, bj_l, w_l = [], [], []
    for i in range(nb):
        for j in range(i, nb):
            bi_l.append(i)
            bj_l.append(j)
            w_l.append(1.0 if i == j else 2.0)
    T = len(bi_l)
    bi = jnp.asarray(bi_l, dtype=jnp.int32)
    bj = jnp.asarray(bj_l, dtype=jnp.int32)
    w = jnp.asarray(w_l, dtype=jnp.float32)

    kernel = functools.partial(
        _cluster_loss_kernel, inv_temperature=float(1.0 / temperature))

    in_bytes = jnp.dtype(matmul_dtype).itemsize
    vmem_limit = _pick_vmem_limit(ts, D, in_bytes)

    partials = pl.pallas_call(
        kernel,
        out_shape=jax.ShapeDtypeStruct((T, 1, ts), jnp.float32),
        grid_spec=pltpu.PrefetchScalarGridSpec(
            num_scalar_prefetch=2,                 # bi, bj block-index tables
            grid=(T,),
            in_specs=[
                pl.BlockSpec((ts, D), lambda t, bi, bj: (bi[t], 0)),   # rows of H
                pl.BlockSpec((D, ts), lambda t, bi, bj: (0, bj[t])),   # cols of H (as (D, ts))
                pl.BlockSpec((ts, 1), lambda t, bi, bj: (bi[t], 0)),   # labels (column view)
                pl.BlockSpec((1, ts), lambda t, bi, bj: (0, bj[t])),   # labels (row view)
            ],
            out_specs=pl.BlockSpec((1, 1, ts), lambda t, bi, bj: (t, 0, 0)),
        ),
        compiler_params=pltpu.CompilerParams(
            dimension_semantics=("parallel",),
            vmem_limit_bytes=vmem_limit),
    )(bi, bj, hn_op, hnt_op, labels_col, labels_row)

    tile_sums = jnp.sum(partials.reshape(T, -1), axis=1)        # (T,)
    total = jnp.sum(tile_sums * w)
    mean_loss = total / (jnp.float32(N) * jnp.float32(N))
    # Match the torch.isnan(cluster_loss) -> 0.0 fallback (warning dropped).
    return jnp.where(jnp.isnan(mean_loss), jnp.float32(0.0), mean_loss)


def _reference_loss(hidden_states, pseudo_labels, temperature):
    h = hidden_states.astype(jnp.float32)
    norm = jnp.sqrt(jnp.sum(h * h, axis=1, keepdims=True))
    h = h / jnp.maximum(norm, 1e-12)
    logits = (h @ h.T) / temperature
    y = (pseudo_labels[:, None] == pseudo_labels[None, :]).astype(jnp.float32)
    loss = (jnp.maximum(logits, 0.0) - logits * y
            + jnp.log1p(jnp.exp(-jnp.abs(logits))))
    m = jnp.mean(loss)
    return jnp.where(jnp.isnan(m), 0.0, m)


if __name__ == "__main__":
    key = jax.random.PRNGKey(0)
    k1, k2 = jax.random.split(key)

    N, D = 128, 32          # N samples, hidden dim 32
    num_clusters = 4
    temperature = 0.5

    hidden_states = jax.random.normal(k1, (N, D), dtype=jnp.float32)
    pseudo_labels = jax.random.randint(k2, (N,), 0, num_clusters, dtype=jnp.int32)

    ref = _reference_loss(hidden_states, pseudo_labels, temperature)

    # Exact-semantics path (f32 MXU operands): 1e-5 equivalence to PyTorch.
    out = cluster_loss(hidden_states, pseudo_labels, temperature)
    out = jax.block_until_ready(out)
    assert jnp.allclose(out, ref, rtol=1e-5, atol=1e-5), (out, ref)

    # Fast path (bf16 MXU operands): looser tolerance, same structure.
    out_bf16 = cluster_loss(hidden_states, pseudo_labels, temperature,
                            matmul_dtype=jnp.bfloat16)
    out_bf16 = jax.block_until_ready(out_bf16)
    assert jnp.allclose(out_bf16, ref, rtol=3e-2, atol=3e-2), (out_bf16, ref)

    print("KERNEL_OK")
</pallas_src>

<mosaic_0001>
module attributes {stable_mosaic.version = 11 : i64} {
  func.func @_cluster_loss_kernel(%arg0: i32, %arg1: memref<1xi32, #tpu.memory_space<smem>>, %arg2: memref<1xi32, #tpu.memory_space<smem>>, %arg3: memref<128x32xf32, #tpu.memory_space<vmem>>, %arg4: memref<32x128xf32, #tpu.memory_space<vmem>>, %arg5: memref<128x1xi32, #tpu.memory_space<vmem>>, %arg6: memref<1x128xi32, #tpu.memory_space<vmem>>, %arg7: memref<1x1x128xf32, #tpu.memory_space<vmem>>) attributes {dimension_semantics = [#tpu.dimension_semantics<parallel>], iteration_bounds = array<i64: 1>, scalar_prefetch = 2 : i64, scratch_operands = 0 : i64, tpu.core_type = #tpu.core_type<tc>, window_params = [{transform_indices = @transform_0, window_bounds = array<i64: 128, 32>}, {transform_indices = @transform_1, window_bounds = array<i64: 32, 128>}, {transform_indices = @transform_2, window_bounds = array<i64: 128, 1>}, {transform_indices = @transform_3, window_bounds = array<i64: 1, 128>}, {transform_indices = @transform_4, window_bounds = array<i64: 1, 1, 128>}]} {
    %c0 = arith.constant 0 : index
    %c0_0 = arith.constant 0 : index
    %0 = vector.load %arg3[%c0, %c0_0] : memref<128x32xf32, #tpu.memory_space<vmem>>, vector<128x32xf32>
    %c0_1 = arith.constant 0 : index
    %c0_2 = arith.constant 0 : index
    %1 = vector.load %arg4[%c0_1, %c0_2] : memref<32x128xf32, #tpu.memory_space<vmem>>, vector<32x128xf32>
    %cst = arith.constant dense<0.000000e+00> : vector<128x128xf32>
    %2 = tpu.matmul %0, %1, %cst {dimension_numbers = #tpu.dot_dimension_numbers<[1], [0], [0], [1], [0, 0, 1, 1], [], []>} : vector<128x32xf32>, vector<32x128xf32>, vector<128x128xf32> -> vector<128x128xf32>
    %cst_3 = arith.constant 2.000000e+00 : f32
    %3 = vector.broadcast %cst_3 : f32 to vector<128x128xf32>
    %4 = arith.mulf %2, %3 : vector<128x128xf32>
    %c0_4 = arith.constant 0 : index
    %c0_5 = arith.constant 0 : index
    %5 = vector.load %arg5[%c0_4, %c0_5] : memref<128x1xi32, #tpu.memory_space<vmem>>, vector<128x1xi32>
    %c0_6 = arith.constant 0 : index
    %c0_7 = arith.constant 0 : index
    %6 = vector.load %arg6[%c0_6, %c0_7] : memref<1x128xi32, #tpu.memory_space<vmem>>, vector<1x128xi32>
    %7 = vector.broadcast %5 : vector<128x1xi32> to vector<128x128xi32>
    %8 = vector.broadcast %6 : vector<1x128xi32> to vector<128x128xi32>
    %9 = arith.cmpi eq, %7, %8 : vector<128x128xi32>
    %10 = math.absf %4 : vector<128x128xf32>
    %11 = arith.addf %4, %10 : vector<128x128xf32>
    %cst_8 = arith.constant 5.000000e-01 : f32
    %12 = vector.broadcast %cst_8 : f32 to vector<128x128xf32>
    %13 = arith.mulf %12, %11 : vector<128x128xf32>
    %cst_9 = arith.constant 0.000000e+00 : f32
    %14 = vector.broadcast %cst_9 : f32 to vector<128x128xf32>
    %15 = arith.select %9, %4, %14 : vector<128x128xi1>, vector<128x128xf32>
    %16 = arith.subf %13, %15 : vector<128x128xf32>
    %cst_10 = arith.constant 0.000000e+00 : f32
    %17 = vector.broadcast %cst_10 : f32 to vector<128x128xf32>
    %18 = arith.subf %17, %10 : vector<128x128xf32>
    %19 = math.exp %18 : vector<128x128xf32>
    %20 = math.log1p %19 : vector<128x128xf32>
    %21 = arith.addf %16, %20 : vector<128x128xf32>
    %cst_11 = arith.constant dense<0.000000e+00> : vector<128xf32>
    %22 = vector.multi_reduction <add>, %21, %cst_11 [0] : vector<128x128xf32> to vector<128xf32>
    %23 = vector.shape_cast %22 : vector<128xf32> to vector<1x128xf32>
    %24 = vector.shape_cast %23 : vector<1x128xf32> to vector<1x1x128xf32>
    %c0_12 = arith.constant 0 : index
    %c0_13 = arith.constant 0 : index
    %c0_14 = arith.constant 0 : index
    %25 = vector.load %arg7[%c0_12, %c0_13, %c0_14] : memref<1x1x128xf32, #tpu.memory_space<vmem>>, vector<1x1x128xf32>
    tpu.vector_store %arg7[%c0_12, %c0_13, %c0_14], %24 {strides = array<i32>} : memref<1x1x128xf32, #tpu.memory_space<vmem>>, vector<1x1x128xf32>,
    return
  }
  func.func @transform_0(%arg0: i32, %arg1: memref<1xi32, #tpu.memory_space<smem>>, %arg2: memref<1xi32, #tpu.memory_space<smem>>) -> (i32, i32) {
    %0 = arith.index_cast %arg0 : i32 to index
    %1 = memref.load %arg1[%0] : memref<1xi32, #tpu.memory_space<smem>>
    %c0_i32 = arith.constant 0 : i32
    %c0_i32_0 = arith.constant 0 : i32
    return %1, %c0_i32 : i32, i32
  }
  func.func @transform_1(%arg0: i32, %arg1: memref<1xi32, #tpu.memory_space<smem>>, %arg2: memref<1xi32, #tpu.memory_space<smem>>) -> (i32, i32) {
    %0 = arith.index_cast %arg0 : i32 to index
    %1 = memref.load %arg2[%0] : memref<1xi32, #tpu.memory_space<smem>>
    %c0_i32 = arith.constant 0 : i32
    %c0_i32_0 = arith.constant 0 : i32
    return %c0_i32, %1 : i32, i32
  }
  func.func @transform_2(%arg0: i32, %arg1: memref<1xi32, #tpu.memory_space<smem>>, %arg2: memref<1xi32, #tpu.memory_space<smem>>) -> (i32, i32) {
    %0 = arith.index_cast %arg0 : i32 to index
    %1 = memref.load %arg1[%0] : memref<1xi32, #tpu.memory_space<smem>>
    %c0_i32 = arith.constant 0 : i32
    %c0_i32_0 = arith.constant 0 : i32
    return %1, %c0_i32 : i32, i32
  }
  func.func @transform_3(%arg0: i32, %arg1: memref<1xi32, #tpu.memory_space<smem>>, %arg2: memref<1xi32, #tpu.memory_space<smem>>) -> (i32, i32) {
    %0 = arith.index_cast %arg0 : i32 to index
    %1 = memref.load %arg2[%0] : memref<1xi32, #tpu.memory_space<smem>>
    %c0_i32 = arith.constant 0 : i32
    %c0_i32_0 = arith.constant 0 : i32
    return %c0_i32, %1 : i32, i32
  }
  func.func @transform_4(%arg0: i32, %arg1: memref<1xi32, #tpu.memory_space<smem>>, %arg2: memref<1xi32, #tpu.memory_space<smem>>) -> (i32, i32, i32) {
    %c0_i32 = arith.constant 0 : i32
    %c0_i32_0 = arith.constant 0 : i32
    %c0_i32_1 = arith.constant 0 : i32
    return %arg0, %c0_i32, %c0_i32_0 : i32, i32, i32
  }
}

</mosaic_0001>

<llo_original>
// kernel: tpu_custom_call.1
$region0: #{tpu_custom_call.1}
  #allocation0 [shape = 'u32[]', space=smem, size = 0x4, offset = 0x4, fixed_abs, tag = 'smem constant byte address 0x4 - core index']
  #allocation1 [shape = 'u32[144,128]{1,0:T(1,128)}', space=vmem, size = 0x12000, scoped, tag = 'internal scratch']
  #allocation2 [shape = 's32[1]{0}', space=sflag, size = 0x4, scoped, tag = 'scoped memory for tpu_custom_call.1']
  #allocation3 [shape = 's32[1]{0:T(128)S(6)}', space=smem, size = 0x200, scoped, tag = 'prefetched SMEM operand 0']
  #allocation4 [shape = 's32[1]{0:T(128)S(6)}', space=smem, size = 0x200, scoped, tag = 'prefetched SMEM operand 1']
  %s0 = inlined_call_operand.<no memory space> [shape: s32[1], index: 0, kind: input, shape index: {}]
  %s1 = inlined_call_operand.<no memory space> [shape: s32[1], index: 1, kind: input, shape index: {}]
  %s2 = inlined_call_operand.vmem [shape: f32[128,32], index: 2, kind: input, shape index: {}]
  %s3 = inlined_call_operand.vmem [shape: f32[32,128], index: 3, kind: input, shape index: {}]
  %s4 = inlined_call_operand.vmem [shape: s32[128,1], index: 4, kind: input, shape index: {}]
  %s5 = inlined_call_operand.vmem [shape: s32[1,128], index: 5, kind: input, shape index: {}]
  %s6 = inlined_call_operand.hbm [shape: f32[1,1,128], index: 6, kind: output, shape index: {}]
  %s7 = sld [smem:[#allocation0]]
  $region26: #{tpu_custom_call.1} parent=0
    _
  %s9 = ssub.s32 1, %s7
  %s10 = scalar_select 0, %s9, %s7
  %11 = sst [smem:[#allocation3]] %s0
  %12 = sst [smem:[#allocation4]] %s1
  $region1: #{tpu_custom_call.1} parent=0
    #allocation5 [shape = 'u8[512]{0}', space=vmem, size = 0x400, scoped, tag = 'output window, operand 0, single buffered']
    #allocation6 [shape = 's32[1]{0}', space=sflag, size = 0x4, scoped, tag = 'scoped memory for tpu_custom_call.1']
    %13 = vsyncpa [#allocation6], 0
    // Predicated region
    $region2: #{tpu_custom_call.1} parent=1 // pred_check
      _
    $region3: #{tpu_custom_call.1} parent=1 // pred_check_branch
      %15 = sbr.rel (0) target = $region5
    $region4: #{tpu_custom_call.1} parent=1 // pred_region
      %s16 = sld [smem:[#allocation3]]
      %s17 = smul.u32 16, %s16
      %p18 = scmp.lt.s32.totalorder %s17, 15
      %s19 = scalar_select %p18, %s17, 15
      %s20 = smul.addr %s19, 8
      %s21 = scalar_lea.vmem %s2, %s20
      %s22 = sld [smem:[#allocation3]]
      %s23 = smul.u32 16, %s22
    $region5: #{tpu_custom_call.1} parent=1 // pred_fallthru
      _
    // Predicated region
    $region6: #{tpu_custom_call.1} parent=1 // pred_check
      _
    $region7: #{tpu_custom_call.1} parent=1 // pred_check_branch
      %25 = sbr.rel (0) target = $region9
    $region8: #{tpu_custom_call.1} parent=1 // pred_region
      %s26 = sld [smem:[#allocation4]]
      %p27 = scmp.lt.s32.totalorder %s26, 0
      %s28 = scalar_select %p27, %s26, 0
      %s29 = smul.addr %s28, 8
      %s30 = scalar_lea.vmem %s3, %s29
      %s31 = sld [smem:[#allocation4]]
    $region9: #{tpu_custom_call.1} parent=1 // pred_fallthru
      _
    // Predicated region
    $region10: #{tpu_custom_call.1} parent=1 // pred_check
      _
    $region11: #{tpu_custom_call.1} parent=1 // pred_check_branch
      %33 = sbr.rel (0) target = $region13
    $region12: #{tpu_custom_call.1} parent=1 // pred_region
      %s34 = sld [smem:[#allocation3]]
      %s35 = smul.u32 16, %s34
      %p36 = scmp.lt.s32.totalorder %s35, 15
      %s37 = scalar_select %p36, %s35, 15
      %s38 = smul.addr %s37, 8
      %s39 = scalar_lea.vmem %s4, %s38
      %s40 = sld [smem:[#allocation3]]
      %s41 = smul.u32 16, %s40
    $region13: #{tpu_custom_call.1} parent=1 // pred_fallthru
      _
    // Predicated region
    $region14: #{tpu_custom_call.1} parent=1 // pred_check
      _
    $region15: #{tpu_custom_call.1} parent=1 // pred_check_branch
      %43 = sbr.rel (0) target = $region17
    $region16: #{tpu_custom_call.1} parent=1 // pred_region
      %s44 = sld [smem:[#allocation4]]
      %p45 = scmp.lt.s32.totalorder %s44, 0
      %s46 = scalar_select %p45, %s44, 0
      %s47 = scalar_lea.vmem %s5, %s46
      %s48 = sld [smem:[#allocation4]]
    $region17: #{tpu_custom_call.1} parent=1 // pred_fallthru
      _
    %s49 = sld [smem:[#allocation3]]
    %s50 = smul.u32 16, %s49
    %p51 = scmp.lt.s32.totalorder %s50, 15
    %s52 = scalar_select %p51, %s50, 15
    %s53 = smul.addr %s52, 8
    %s54 = scalar_lea.vmem %s2, %s53
    %s55 = sld [smem:[#allocation4]]
    %p56 = scmp.lt.s32.totalorder %s55, 0
    %s57 = scalar_select %p56, %s55, 0
    %s58 = smul.addr %s57, 8
    %s59 = scalar_lea.vmem %s3, %s58
    %s60 = sld [smem:[#allocation3]]
    %s61 = smul.u32 16, %s60
    %p62 = scmp.lt.s32.totalorder %s61, 15
    %s63 = scalar_select %p62, %s61, 15
    %s64 = smul.addr %s63, 8
    %s65 = scalar_lea.vmem %s4, %s64
    %s66 = sld [smem:[#allocation4]]
    %p67 = scmp.lt.s32.totalorder %s66, 0
    %s68 = scalar_select %p67, %s66, 0
    %s69 = scalar_lea.vmem %s5, %s68
    %s70 = sld [smem:[#allocation3]]
    %s71 = smul.u32 16, %s70
    %p72 = scmp.lt.s32.totalorder %s71, 15
    %s73 = scalar_select %p72, %s71, 15
    %s74 = smul.addr %s73, 8
    %s75 = scalar_lea.vmem %s2, %s74
    %s76 = sld [smem:[#allocation3]]
    %s77 = smul.u32 16, %s76
    %s78 = sld [smem:[#allocation4]]
    %p79 = scmp.lt.s32.totalorder %s78, 0
    %s80 = scalar_select %p79, %s78, 0
    %s81 = smul.addr %s80, 8
    %s82 = scalar_lea.vmem %s3, %s81
    %s83 = sld [smem:[#allocation4]]
    %s84 = sld [smem:[#allocation3]]
    %s85 = smul.u32 16, %s84
    %p86 = scmp.lt.s32.totalorder %s85, 15
    %s87 = scalar_select %p86, %s85, 15
    %s88 = smul.addr %s87, 8
    %s89 = scalar_lea.vmem %s4, %s88
    %s90 = sld [smem:[#allocation3]]
    %s91 = smul.u32 16, %s90
    %s92 = sld [smem:[#allocation4]]
    %p93 = scmp.lt.s32.totalorder %s92, 0
    %s94 = scalar_select %p93, %s92, 0
    %s95 = scalar_lea.vmem %s5, %s94
    %s96 = sld [smem:[#allocation4]]
    %v97 = vld [vmem:[%s75] sm:$0xff]
    %v98 = vld [vmem:[%s75 + $0x8] sm:$0xff]
    %v99 = vld [vmem:[%s75 + $0x10] sm:$0xff]
    %v100 = vld [vmem:[%s75 + $0x18] sm:$0xff]
    %v101 = vld [vmem:[%s75 + $0x20] sm:$0xff]
    %v102 = vld [vmem:[%s75 + $0x28] sm:$0xff]
    %v103 = vld [vmem:[%s75 + $0x30] sm:$0xff]
    %v104 = vld [vmem:[%s75 + $0x38] sm:$0xff]
    %v105 = vld [vmem:[%s75 + $0x40] sm:$0xff]
    %v106 = vld [vmem:[%s75 + $0x48] sm:$0xff]
    %v107 = vld [vmem:[%s75 + $0x50] sm:$0xff]
    %v108 = vld [vmem:[%s75 + $0x58] sm:$0xff]
    %v109 = vld [vmem:[%s75 + $0x60] sm:$0xff]
    %v110 = vld [vmem:[%s75 + $0x68] sm:$0xff]
    %v111 = vld [vmem:[%s75 + $0x70] sm:$0xff]
    %v112 = vld [vmem:[%s75 + $0x78] sm:$0xff]
    %v113 = vld [vmem:[%s82] sm:$0xff]
    %v114 = vld [vmem:[%s82 + $0x8] sm:$0xff]
    %v115 = vld [vmem:[%s82 + $0x10] sm:$0xff]
    %v116 = vld [vmem:[%s82 + $0x18] sm:$0xff]
    %vm117 = vcmask 261120
    %v119 = vsel %vm117, %v97, 0
    %v122 = vsel %vm117, %v98, 0
    %v125 = vsel %vm117, %v99, 0
    %v128 = vsel %vm117, %v100, 0
    %v131 = vsel %vm117, %v101, 0
    %v134 = vsel %vm117, %v102, 0
    %v137 = vsel %vm117, %v103, 0
    %v140 = vsel %vm117, %v104, 0
    %v143 = vsel %vm117, %v105, 0
    %v146 = vsel %vm117, %v106, 0
    %v149 = vsel %vm117, %v107, 0
    %v152 = vsel %vm117, %v108, 0
    %v155 = vsel %vm117, %v109, 0
    %v158 = vsel %vm117, %v110, 0
    %v161 = vsel %vm117, %v111, 0
    %v164 = vsel %vm117, %v112, 0
    %166 = vmatprep.subr.mxu0 0.0
    %167 = vmatpush1.msra.mxu0 0.0
    %168 = vmatprep.subr.mxu0 0.0
    %169 = vmatpush1.msra.mxu0 0.0
    %170 = vmatprep.subr.mxu0 0.0
    %171 = vmatpush1.msra.mxu0 0.0
    %172 = vmatprep.subr.mxu0 0.0
    %173 = vmatpush1.msra.mxu0 0.0
    %174 = vmatprep.subr.mxu0 0.0
    %175 = vmatpush1.msra.mxu0 0.0
    %176 = vmatprep.subr.mxu0 0.0
    %177 = vmatpush1.msra.mxu0 0.0
    %178 = vmatprep.subr.mxu0 0.0
    %179 = vmatpush1.msra.mxu0 0.0
    %180 = vmatprep.subr.mxu0 0.0
    %181 = vmatpush1.msra.mxu0 0.0
    %182 = vmatprep.subr.mxu0 0.0
    %183 = vmatpush1.msra.mxu0 0.0
    %184 = vmatprep.subr.mxu0 0.0
    %185 = vmatpush1.msra.mxu0 0.0
    %186 = vmatprep.subr.mxu0 0.0
    %187 = vmatpush1.msra.mxu0 0.0
    %188 = vmatprep.subr.mxu0 0.0
    %189 = vmatpush1.msra.mxu0 0.0
    %190 = vmatprep.subr.mxu0 0.0
    %191 = vmatpush1.msra.mxu0 %v116
    %192 = vmatprep.subr.mxu0 0.0
    %193 = vmatpush1.msra.mxu0 %v115
    %194 = vmatprep.subr.mxu0 0.0
    %195 = vmatpush1.msra.mxu0 %v114
    %196 = vmatprep.subr.mxu0 0.0
    %197 = vmatpush1.msra.mxu0 %v113
    %198 = vmatprep.subr.mxu0 0.0
    %199 = vmatpush2.msra.mxu0 0.0
    %200 = vmatprep.subr.mxu0 0.0
    %201 = vmatpush2.msra.mxu0 0.0
    %202 = vmatprep.subr.mxu0 0.0
    %203 = vmatpush2.msra.mxu0 0.0
    %204 = vmatprep.subr.mxu0 0.0
    %205 = vmatpush2.msra.mxu0 0.0
    %206 = vmatprep.subr.mxu0 0.0
    %207 = vmatpush2.msra.mxu0 0.0
    %208 = vmatprep.subr.mxu0 0.0
    %209 = vmatpush2.msra.mxu0 0.0
    %210 = vmatprep.subr.mxu0 0.0
    %211 = vmatpush2.msra.mxu0 0.0
    %212 = vmatprep.subr.mxu0 0.0
    %213 = vmatpush2.msra.mxu0 0.0
    %214 = vmatprep.subr.mxu0 0.0
    %215 = vmatpush2.msra.mxu0 0.0
    %216 = vmatprep.subr.mxu0 0.0
    %217 = vmatpush2.msra.mxu0 0.0
    %218 = vmatprep.subr.mxu0 0.0
    %219 = vmatpush2.msra.mxu0 0.0
    %220 = vmatprep.subr.mxu0 0.0
    %221 = vmatpush2.msra.mxu0 0.0
    %222 = vmatprep.subr.mxu0 0.0
    %223 = vmatpush2.msra.mxu0 0.0
    %224 = vmatprep.subr.mxu0 0.0
    %225 = vmatpush2.msra.mxu0 0.0
    %226 = vmatprep.subr.mxu0 0.0
    %227 = vmatpush2.msra.mxu0 0.0
    %228 = vmatprep.subr.mxu0 0.0
    %229 = vmatpush2.msra.mxu0 0.0
    %230 = vmatprep.mubr.f32.mxu0 0.0
    %231 = vmatmul.mubr.f32.gmra.mxu0 %v119
    %v232 = vpop.f32.mrf.mxu0
    %v233 = vadd.f32 0.0, %v232
    %v234 = vpop.f32.mrf.mxu0
    %235 = vmatprep.mubr.f32.mxu0 0.0
    %236 = vmatmul.mubr.f32.gmra.mxu0 %v122
    %v237 = vpop.f32.mrf.mxu0
    %v238 = vadd.f32 0.0, %v237
    %v239 = vpop.f32.mrf.mxu0
    %240 = vmatprep.mubr.f32.mxu0 0.0
    %241 = vmatmul.mubr.f32.gmra.mxu0 %v125
    %v242 = vpop.f32.mrf.mxu0
    %v243 = vadd.f32 0.0, %v242
    %v244 = vpop.f32.mrf.mxu0
    %245 = vmatprep.mubr.f32.mxu0 0.0
    %246 = vmatmul.mubr.f32.gmra.mxu0 %v128
    %v247 = vpop.f32.mrf.mxu0
    %v248 = vadd.f32 0.0, %v247
    %v249 = vpop.f32.mrf.mxu0
    %250 = vmatprep.mubr.f32.mxu0 0.0
    %251 = vmatmul.mubr.f32.gmra.mxu0 %v131
    %v252 = vpop.f32.mrf.mxu0
    %v253 = vadd.f32 0.0, %v252
    %v254 = vpop.f32.mrf.mxu0
    %255 = vmatprep.mubr.f32.mxu0 0.0
    %256 = vmatmul.mubr.f32.gmra.mxu0 %v134
    %v257 = vpop.f32.mrf.mxu0
    %v258 = vadd.f32 0.0, %v257
    %v259 = vpop.f32.mrf.mxu0
    %260 = vmatprep.mubr.f32.mxu0 0.0
    %261 = vmatmul.mubr.f32.gmra.mxu0 %v137
    %v262 = vpop.f32.mrf.mxu0
    %v263 = vadd.f32 0.0, %v262
    %v264 = vpop.f32.mrf.mxu0
    %265 = vmatprep.mubr.f32.mxu0 0.0
    %266 = vmatmul.mubr.f32.gmra.mxu0 %v140
    %v267 = vpop.f32.mrf.mxu0
    %v268 = vadd.f32 0.0, %v267
    %v269 = vpop.f32.mrf.mxu0
    %270 = vmatprep.mubr.f32.mxu0 0.0
    %271 = vmatmul.mubr.f32.gmra.mxu0 %v143
    %v272 = vpop.f32.mrf.mxu0
    %v273 = vadd.f32 0.0, %v272
    %v274 = vpop.f32.mrf.mxu0
    %275 = vmatprep.mubr.f32.mxu0 0.0
    %276 = vmatmul.mubr.f32.gmra.mxu0 %v146
    %v277 = vpop.f32.mrf.mxu0
    %v278 = vadd.f32 0.0, %v277
    %v279 = vpop.f32.mrf.mxu0
    %280 = vmatprep.mubr.f32.mxu0 0.0
    %281 = vmatmul.mubr.f32.gmra.mxu0 %v149
    %v282 = vpop.f32.mrf.mxu0
    %v283 = vadd.f32 0.0, %v282
    %v284 = vpop.f32.mrf.mxu0
    %285 = vmatprep.mubr.f32.mxu0 0.0
    %286 = vmatmul.mubr.f32.gmra.mxu0 %v152
    %v287 = vpop.f32.mrf.mxu0
    %v288 = vadd.f32 0.0, %v287
    %v289 = vpop.f32.mrf.mxu0
    %290 = vmatprep.mubr.f32.mxu0 0.0
    %291 = vmatmul.mubr.f32.gmra.mxu0 %v155
    %v292 = vpop.f32.mrf.mxu0
    %v293 = vadd.f32 0.0, %v292
    %v294 = vpop.f32.mrf.mxu0
    %295 = vmatprep.mubr.f32.mxu0 0.0
    %296 = vmatmul.mubr.f32.gmra.mxu0 %v158
    %v297 = vpop.f32.mrf.mxu0
    %v298 = vadd.f32 0.0, %v297
    %v299 = vpop.f32.mrf.mxu0
    %300 = vmatprep.mubr.f32.mxu0 0.0
    %301 = vmatmul.mubr.f32.gmra.mxu0 %v161
    %v302 = vpop.f32.mrf.mxu0
    %v303 = vadd.f32 0.0, %v302
    %v304 = vpop.f32.mrf.mxu0
    %305 = vmatprep.mubr.f32.mxu0 0.0
    %306 = vmatmul.mubr.f32.gmra.mxu0 %v164
    %v307 = vpop.f32.mrf.mxu0
    %v308 = vadd.f32 0.0, %v307
    %v309 = vpop.f32.mrf.mxu0
    %310 = vdwg.mxu0
    %v311 = vmul.f32 %v233, 2.0
    %v312 = vmul.f32 %v238, 2.0
    %v313 = vmul.f32 %v243, 2.0
    %v314 = vmul.f32 %v248, 2.0
    %v315 = vmul.f32 %v253, 2.0
    %v316 = vmul.f32 %v258, 2.0
    %v317 = vmul.f32 %v263, 2.0
    %v318 = vmul.f32 %v268, 2.0
    %v319 = vmul.f32 %v273, 2.0
    %v320 = vmul.f32 %v278, 2.0
    %v321 = vmul.f32 %v283, 2.0
    %v322 = vmul.f32 %v288, 2.0
    %v323 = vmul.f32 %v293, 2.0
    %v324 = vmul.f32 %v298, 2.0
    %v325 = vmul.f32 %v303, 2.0
    %v326 = vmul.f32 %v308, 2.0
    %v327 = vld [vmem:[%s89] sm:$0xff]
    %v328 = vld [vmem:[%s89 + $0x8] sm:$0xff]
    %v329 = vld [vmem:[%s89 + $0x10] sm:$0xff]
    %v330 = vld [vmem:[%s89 + $0x18] sm:$0xff]
    %v331 = vld [vmem:[%s89 + $0x20] sm:$0xff]
    %v332 = vld [vmem:[%s89 + $0x28] sm:$0xff]
    %v333 = vld [vmem:[%s89 + $0x30] sm:$0xff]
    %v334 = vld [vmem:[%s89 + $0x38] sm:$0xff]
    %v335 = vld [vmem:[%s89 + $0x40] sm:$0xff]
    %v336 = vld [vmem:[%s89 + $0x48] sm:$0xff]
    %v337 = vld [vmem:[%s89 + $0x50] sm:$0xff]
    %v338 = vld [vmem:[%s89 + $0x58] sm:$0xff]
    %v339 = vld [vmem:[%s89 + $0x60] sm:$0xff]
    %v340 = vld [vmem:[%s89 + $0x68] sm:$0xff]
    %v341 = vld [vmem:[%s89 + $0x70] sm:$0xff]
    %v342 = vld [vmem:[%s89 + $0x78] sm:$0xff]
    %v343 = vld [vmem:[%s95] sm:$0x1]
    %344 = vset.pattern.permute.xlu0 0
    %345 = vperm.xlu0 %344, %v327
    %v346 = vpop.permute.xlu0 %345
    %347 = vset.pattern.permute.xlu0 0
    %348 = vperm.xlu0 %347, %v328
    %v349 = vpop.permute.xlu0 %348
    %350 = vset.pattern.permute.xlu0 0
    %351 = vperm.xlu0 %350, %v329
    %v352 = vpop.permute.xlu0 %351
    %353 = vset.pattern.permute.xlu0 0
    %354 = vperm.xlu0 %353, %v330
    %v355 = vpop.permute.xlu0 %354
    %356 = vset.pattern.permute.xlu0 0
    %357 = vperm.xlu0 %356, %v331
    %v358 = vpop.permute.xlu0 %357
    %359 = vset.pattern.permute.xlu0 0
    %360 = vperm.xlu0 %359, %v332
    %v361 = vpop.permute.xlu0 %360
    %362 = vset.pattern.permute.xlu0 0
    %363 = vperm.xlu0 %362, %v333
    %v364 = vpop.permute.xlu0 %363
    %365 = vset.pattern.permute.xlu0 0
    %366 = vperm.xlu0 %365, %v334
    %v367 = vpop.permute.xlu0 %366
    %368 = vset.pattern.permute.xlu0 0
    %369 = vperm.xlu0 %368, %v335
    %v370 = vpop.permute.xlu0 %369
    %371 = vset.pattern.permute.xlu0 0
    %372 = vperm.xlu0 %371, %v336
    %v373 = vpop.permute.xlu0 %372
    %374 = vset.pattern.permute.xlu0 0
    %375 = vperm.xlu0 %374, %v337
    %v376 = vpop.permute.xlu0 %375
    %377 = vset.pattern.permute.xlu0 0
    %378 = vperm.xlu0 %377, %v338
    %v379 = vpop.permute.xlu0 %378
    %380 = vset.pattern.permute.xlu0 0
    %381 = vperm.xlu0 %380, %v339
    %v382 = vpop.permute.xlu0 %381
    %383 = vset.pattern.permute.xlu0 0
    %384 = vperm.xlu0 %383, %v340
    %v385 = vpop.permute.xlu0 %384
    %386 = vset.pattern.permute.xlu0 0
    %387 = vperm.xlu0 %386, %v341
    %v388 = vpop.permute.xlu0 %387
    %389 = vset.pattern.permute.xlu0 0
    %390 = vperm.xlu0 %389, %v342
    %v391 = vpop.permute.xlu0 %390
    %v392 = vlaneseq
    %v393 = vshrl.u32 %v392, 7
    %v394 = vsub.s32 0, %v393
    %v395 = vrot.slane %v343, %v394
    %vm396 = vcmp.eq.s32.totalorder %v346, %v395
    %vm397 = vcmp.eq.s32.totalorder %v349, %v395
    %vm398 = vcmp.eq.s32.totalorder %v352, %v395
    %vm399 = vcmp.eq.s32.totalorder %v355, %v395
    %vm400 = vcmp.eq.s32.totalorder %v358, %v395
    %vm401 = vcmp.eq.s32.totalorder %v361, %v395
    %vm402 = vcmp.eq.s32.totalorder %v364, %v395
    %vm403 = vcmp.eq.s32.totalorder %v367, %v395
    %vm404 = vcmp.eq.s32.totalorder %v370, %v395
    %vm405 = vcmp.eq.s32.totalorder %v373, %v395
    %vm406 = vcmp.eq.s32.totalorder %v376, %v395
    %vm407 = vcmp.eq.s32.totalorder %v379, %v395
    %vm408 = vcmp.eq.s32.totalorder %v382, %v395
    %vm409 = vcmp.eq.s32.totalorder %v385, %v395
    %vm410 = vcmp.eq.s32.totalorder %v388, %v395
    %vm411 = vcmp.eq.s32.totalorder %v391, %v395
    %v412 = vand.u32 2147483647, %v311
    %v413 = vand.u32 2147483647, %v312
    %v414 = vand.u32 2147483647, %v313
    %v415 = vand.u32 2147483647, %v314
    %v416 = vand.u32 2147483647, %v315
    %v417 = vand.u32 2147483647, %v316
    %v418 = vand.u32 2147483647, %v317
    %v419 = vand.u32 2147483647, %v318
    %v420 = vand.u32 2147483647, %v319
    %v421 = vand.u32 2147483647, %v320
    %v422 = vand.u32 2147483647, %v321
    %v423 = vand.u32 2147483647, %v322
    %v424 = vand.u32 2147483647, %v323
    %v425 = vand.u32 2147483647, %v324
    %v426 = vand.u32 2147483647, %v325
    %v427 = vand.u32 2147483647, %v326
    %v428 = vadd.f32 %v311, %v412
    %v429 = vadd.f32 %v312, %v413
    %v430 = vadd.f32 %v313, %v414
    %v431 = vadd.f32 %v314, %v415
    %v432 = vadd.f32 %v315, %v416
    %v433 = vadd.f32 %v316, %v417
    %v434 = vadd.f32 %v317, %v418
    %v435 = vadd.f32 %v318, %v419
    %v436 = vadd.f32 %v319, %v420
    %v437 = vadd.f32 %v320, %v421
    %v438 = vadd.f32 %v321, %v422
    %v439 = vadd.f32 %v322, %v423
    %v440 = vadd.f32 %v323, %v424
    %v441 = vadd.f32 %v324, %v425
    %v442 = vadd.f32 %v325, %v426
    %v443 = vadd.f32 %v326, %v427
    %v444 = vmul.f32 %v428, 0.5
    %v445 = vmul.f32 %v429, 0.5
    %v446 = vmul.f32 %v430, 0.5
    %v447 = vmul.f32 %v431, 0.5
    %v448 = vmul.f32 %v432, 0.5
    %v449 = vmul.f32 %v433, 0.5
    %v450 = vmul.f32 %v434, 0.5
    %v451 = vmul.f32 %v435, 0.5
    %v452 = vmul.f32 %v436, 0.5
    %v453 = vmul.f32 %v437, 0.5
    %v454 = vmul.f32 %v438, 0.5
    %v455 = vmul.f32 %v439, 0.5
    %v456 = vmul.f32 %v440, 0.5
    %v457 = vmul.f32 %v441, 0.5
    %v458 = vmul.f32 %v442, 0.5
    %v459 = vmul.f32 %v443, 0.5
    %v460 = vsel %vm396, %v311, 0.0
    %v461 = vsel %vm397, %v312, 0.0
    %v462 = vsel %vm398, %v313, 0.0
    %v463 = vsel %vm399, %v314, 0.0
    %v464 = vsel %vm400, %v315, 0.0
    %v465 = vsel %vm401, %v316, 0.0
    %v466 = vsel %vm402, %v317, 0.0
    %v467 = vsel %vm403, %v318, 0.0
    %v468 = vsel %vm404, %v319, 0.0
    %v469 = vsel %vm405, %v320, 0.0
    %v470 = vsel %vm406, %v321, 0.0
    %v471 = vsel %vm407, %v322, 0.0
    %v472 = vsel %vm408, %v323, 0.0
    %v473 = vsel %vm409, %v324, 0.0
    %v474 = vsel %vm410, %v325, 0.0
    %v475 = vsel %vm411, %v326, 0.0
    %v476 = vsub.f32 %v444, %v460
    %v477 = vsub.f32 %v445, %v461
    %v478 = vsub.f32 %v446, %v462
    %v479 = vsub.f32 %v447, %v463
    %v480 = vsub.f32 %v448, %v464
    %v481 = vsub.f32 %v449, %v465
    %v482 = vsub.f32 %v450, %v466
    %v483 = vsub.f32 %v451, %v467
    %v484 = vsub.f32 %v452, %v468
    %v485 = vsub.f32 %v453, %v469
    %v486 = vsub.f32 %v454, %v470
    %v487 = vsub.f32 %v455, %v471
    %v488 = vsub.f32 %v456, %v472
    %v489 = vsub.f32 %v457, %v473
    %v490 = vsub.f32 %v458, %v474
    %v491 = vsub.f32 %v459, %v475
    %v492 = vsub.f32 0.0, %v412
    %v493 = vsub.f32 0.0, %v413
    %v494 = vsub.f32 0.0, %v414
    %v495 = vsub.f32 0.0, %v415
    %v496 = vsub.f32 0.0, %v416
    %v497 = vsub.f32 0.0, %v417
    %v498 = vsub.f32 0.0, %v418
    %v499 = vsub.f32 0.0, %v419
    %v500 = vsub.f32 0.0, %v420
    %v501 = vsub.f32 0.0, %v421
    %v502 = vsub.f32 0.0, %v422
    %v503 = vsub.f32 0.0, %v423
    %v504 = vsub.f32 0.0, %v424
    %v505 = vsub.f32 0.0, %v425
    %v506 = vsub.f32 0.0, %v426
    %v507 = vsub.f32 0.0, %v427
    %v508 = vmul.f32 %v492, 1.442695
    %v509 = vpow.pop %v508
    %v510 = vmul.f32 %v493, 1.442695
    %v511 = vpow.pop %v510
    %v512 = vmul.f32 %v494, 1.442695
    %v513 = vpow.pop %v512
    %v514 = vmul.f32 %v495, 1.442695
    %v515 = vpow.pop %v514
    %v516 = vmul.f32 %v496, 1.442695
    %v517 = vpow.pop %v516
    %v518 = vmul.f32 %v497, 1.442695
    %v519 = vpow.pop %v518
    %v520 = vmul.f32 %v498, 1.442695
    %v521 = vpow.pop %v520
    %v522 = vmul.f32 %v499, 1.442695
    %v523 = vpow.pop %v522
    %v524 = vmul.f32 %v500, 1.442695
    %v525 = vpow.pop %v524
    %v526 = vmul.f32 %v501, 1.442695
    %v527 = vpow.pop %v526
    %v528 = vmul.f32 %v502, 1.442695
    %v529 = vpow.pop %v528
    %v530 = vmul.f32 %v503, 1.442695
    %v531 = vpow.pop %v530
    %v532 = vmul.f32 %v504, 1.442695
    %v533 = vpow.pop %v532
    %v534 = vmul.f32 %v505, 1.442695
    %v535 = vpow.pop %v534
    %v536 = vmul.f32 %v506, 1.442695
    %v537 = vpow.pop %v536
    %v538 = vmul.f32 %v507, 1.442695
    %v539 = vpow.pop %v538
    %v540 = vadd.f32 %v509, 1.0
    %v541 = vlog2.pop %v540
    %v542 = vmul.f32 %v541, 0.6931472
    %v543 = vmul.f32 -0.5, %v509
    %v544 = vadd.f32 %v543, 1.0
    %v545 = vmul.f32 %v544, %v509
    %v546 = vand.u32 2147483647, %v509
    %vm547 = vcmp.lt.f32.partialorder %v546, 0.0004427343
    %v548 = vsel %vm547, %v545, %v542
    %v549 = vadd.f32 %v511, 1.0
    %v550 = vlog2.pop %v549
    %v551 = vmul.f32 %v550, 0.6931472
    %v552 = vmul.f32 -0.5, %v511
    %v553 = vadd.f32 %v552, 1.0
    %v554 = vmul.f32 %v553, %v511
    %v555 = vand.u32 2147483647, %v511
    %vm556 = vcmp.lt.f32.partialorder %v555, 0.0004427343
    %v557 = vsel %vm556, %v554, %v551
    %v558 = vadd.f32 %v513, 1.0
    %v559 = vlog2.pop %v558
    %v560 = vmul.f32 %v559, 0.6931472
    %v561 = vmul.f32 -0.5, %v513
    %v562 = vadd.f32 %v561, 1.0
    %v563 = vmul.f32 %v562, %v513
    %v564 = vand.u32 2147483647, %v513
    %vm565 = vcmp.lt.f32.partialorder %v564, 0.0004427343
    %v566 = vsel %vm565, %v563, %v560
    %v567 = vadd.f32 %v515, 1.0
    %v568 = vlog2.pop %v567
    %v569 = vmul.f32 %v568, 0.6931472
    %v570 = vmul.f32 -0.5, %v515
    %v571 = vadd.f32 %v570, 1.0
    %v572 = vmul.f32 %v571, %v515
    %v573 = vand.u32 2147483647, %v515
    %vm574 = vcmp.lt.f32.partialorder %v573, 0.0004427343
    %v575 = vsel %vm574, %v572, %v569
    %v576 = vadd.f32 %v517, 1.0
    %v577 = vlog2.pop %v576
    %v578 = vmul.f32 %v577, 0.6931472
    %v579 = vmul.f32 -0.5, %v517
    %v580 = vadd.f32 %v579, 1.0
    %v581 = vmul.f32 %v580, %v517
    %v582 = vand.u32 2147483647, %v517
    %vm583 = vcmp.lt.f32.partialorder %v582, 0.0004427343
    %v584 = vsel %vm583, %v581, %v578
    %v585 = vadd.f32 %v519, 1.0
    %v586 = vlog2.pop %v585
    %v587 = vmul.f32 %v586, 0.6931472
    %v588 = vmul.f32 -0.5, %v519
    %v589 = vadd.f32 %v588, 1.0
    %v590 = vmul.f32 %v589, %v519
    %v591 = vand.u32 2147483647, %v519
    %vm592 = vcmp.lt.f32.partialorder %v591, 0.0004427343
    %v593 = vsel %vm592, %v590, %v587
    %v594 = vadd.f32 %v521, 1.0
    %v595 = vlog2.pop %v594
    %v596 = vmul.f32 %v595, 0.6931472
    %v597 = vmul.f32 -0.5, %v521
    %v598 = vadd.f32 %v597, 1.0
    %v599 = vmul.f32 %v598, %v521
    %v600 = vand.u32 2147483647, %v521
    %vm601 = vcmp.lt.f32.partialorder %v600, 0.0004427343
    %v602 = vsel %vm601, %v599, %v596
    %v603 = vadd.f32 %v523, 1.0
    %v604 = vlog2.pop %v603
    %v605 = vmul.f32 %v604, 0.6931472
    %v606 = vmul.f32 -0.5, %v523
    %v607 = vadd.f32 %v606, 1.0
    %v608 = vmul.f32 %v607, %v523
    %v609 = vand.u32 2147483647, %v523
    %vm610 = vcmp.lt.f32.partialorder %v609, 0.0004427343
    %v611 = vsel %vm610, %v608, %v605
    %v612 = vadd.f32 %v525, 1.0
    %v613 = vlog2.pop %v612
    %v614 = vmul.f32 %v613, 0.6931472
    %v615 = vmul.f32 -0.5, %v525
    %v616 = vadd.f32 %v615, 1.0
    %v617 = vmul.f32 %v616, %v525
    %v618 = vand.u32 2147483647, %v525
    %vm619 = vcmp.lt.f32.partialorder %v618, 0.0004427343
    %v620 = vsel %vm619, %v617, %v614
    %v621 = vadd.f32 %v527, 1.0
    %v622 = vlog2.pop %v621
    %v623 = vmul.f32 %v622, 0.6931472
    %v624 = vmul.f32 -0.5, %v527
    %v625 = vadd.f32 %v624, 1.0
    %v626 = vmul.f32 %v625, %v527
    %v627 = vand.u32 2147483647, %v527
    %vm628 = vcmp.lt.f32.partialorder %v627, 0.0004427343
    %v629 = vsel %vm628, %v626, %v623
    %v630 = vadd.f32 %v529, 1.0
    %v631 = vlog2.pop %v630
    %v632 = vmul.f32 %v631, 0.6931472
    %v633 = vmul.f32 -0.5, %v529
    %v634 = vadd.f32 %v633, 1.0
    %v635 = vmul.f32 %v634, %v529
    %v636 = vand.u32 2147483647, %v529
    %vm637 = vcmp.lt.f32.partialorder %v636, 0.0004427343
    %v638 = vsel %vm637, %v635, %v632
    %v639 = vadd.f32 %v531, 1.0
    %v640 = vlog2.pop %v639
    %v641 = vmul.f32 %v640, 0.6931472
    %v642 = vmul.f32 -0.5, %v531
    %v643 = vadd.f32 %v642, 1.0
    %v644 = vmul.f32 %v643, %v531
    %v645 = vand.u32 2147483647, %v531
    %vm646 = vcmp.lt.f32.partialorder %v645, 0.0004427343
    %v647 = vsel %vm646, %v644, %v641
    %v648 = vadd.f32 %v533, 1.0
    %v649 = vlog2.pop %v648
    %v650 = vmul.f32 %v649, 0.6931472
    %v651 = vmul.f32 -0.5, %v533
    %v652 = vadd.f32 %v651, 1.0
    %v653 = vmul.f32 %v652, %v533
    %v654 = vand.u32 2147483647, %v533
    %vm655 = vcmp.lt.f32.partialorder %v654, 0.0004427343
    %v656 = vsel %vm655, %v653, %v650
    %v657 = vadd.f32 %v535, 1.0
    %v658 = vlog2.pop %v657
    %v659 = vmul.f32 %v658, 0.6931472
    %v660 = vmul.f32 -0.5, %v535
    %v661 = vadd.f32 %v660, 1.0
    %v662 = vmul.f32 %v661, %v535
    %v663 = vand.u32 2147483647, %v535
    %vm664 = vcmp.lt.f32.partialorder %v663, 0.0004427343
    %v665 = vsel %vm664, %v662, %v659
    %v666 = vadd.f32 %v537, 1.0
    %v667 = vlog2.pop %v666
    %v668 = vmul.f32 %v667, 0.6931472
    %v669 = vmul.f32 -0.5, %v537
    %v670 = vadd.f32 %v669, 1.0
    %v671 = vmul.f32 %v670, %v537
    %v672 = vand.u32 2147483647, %v537
    %vm673 = vcmp.lt.f32.partialorder %v672, 0.0004427343
    %v674 = vsel %vm673, %v671, %v668
    %v675 = vadd.f32 %v539, 1.0
    %v676 = vlog2.pop %v675
    %v677 = vmul.f32 %v676, 0.6931472
    %v678 = vmul.f32 -0.5, %v539
    %v679 = vadd.f32 %v678, 1.0
    %v680 = vmul.f32 %v679, %v539
    %v681 = vand.u32 2147483647, %v539
    %vm682 = vcmp.lt.f32.partialorder %v681, 0.0004427343
    %v683 = vsel %vm682, %v680, %v677
    %v684 = vadd.f32 %v476, %v548
    %v685 = vadd.f32 %v477, %v557
    %v686 = vadd.f32 %v478, %v566
    %v687 = vadd.f32 %v479, %v575
    %v688 = vadd.f32 %v480, %v584
    %v689 = vadd.f32 %v481, %v593
    %v690 = vadd.f32 %v482, %v602
    %v691 = vadd.f32 %v483, %v611
    %v692 = vadd.f32 %v484, %v620
    %v693 = vadd.f32 %v485, %v629
    %v694 = vadd.f32 %v486, %v638
    %v695 = vadd.f32 %v487, %v647
    %v696 = vadd.f32 %v488, %v656
    %v697 = vadd.f32 %v489, %v665
    %v698 = vadd.f32 %v490, %v674
    %v699 = vadd.f32 %v491, %v683
    %v700 = vadd.f32 %v684, %v685
    %v701 = vadd.f32 %v700, %v686
    %v702 = vadd.f32 %v701, %v687
    %v703 = vadd.f32 %v702, %v688
    %v704 = vadd.f32 %v703, %v689
    %v705 = vadd.f32 %v704, %v690
    %v706 = vadd.f32 %v705, %v691
    %v707 = vadd.f32 %v706, %v692
    %v708 = vadd.f32 %v707, %v693
    %v709 = vadd.f32 %v708, %v694
    %v710 = vadd.f32 %v709, %v695
    %v711 = vadd.f32 %v710, %v696
    %v712 = vadd.f32 %v711, %v697
    %v713 = vadd.f32 %v712, %v698
    %v714 = vadd.f32 %v713, %v699
    %v715 = vrot.slane %v714, 4
    %v716 = vadd.f32 %v714, %v715
    %v717 = vrot.slane %v716, 2
    %v718 = vadd.f32 %v716, %v717
    %v719 = vrot.slane %v718, 1
    %v720 = vadd.f32 %v718, %v719
    %721 = vst [vmem:[#allocation5] sm:$0x1] %v720
    // Predicated region
    $region18: #{tpu_custom_call.1} parent=1 // pred_check
      _
    $region19: #{tpu_custom_call.1} parent=1 // pred_check_branch
      %723 = sbr.rel (0) target = $region21
    $region20: #{tpu_custom_call.1} parent=1 // pred_region
      %s725 = ssub.s32 16, 16
      %726 = vsyncadd [#allocation6], %s725
      %s728 = sshll.u32 [#allocation5], 4
      %s729 = int_to_ptr.vmem [resolvable:$true] %s728
      %731 = dma.vmem_to_hbm [thread:$0]  %s729, 16, %s6, [#allocation6]
    $region21: #{tpu_custom_call.1} parent=1 // pred_fallthru
      _
    // Predicated region
    $region22: #{tpu_custom_call.1} parent=1 // pred_check
      _
    $region23: #{tpu_custom_call.1} parent=1 // pred_check_branch
      %733 = sbr.rel (0) target = $region25
    $region24: #{tpu_custom_call.1} parent=1 // pred_region
      %734 = dma.done [#allocation6], 16
    $region25: #{tpu_custom_call.1} parent=1 // pred_fallthru
      _
    %735 = vsyncpa [#allocation6], 1

</llo_original>
